<compile_context>
chip_gen: v6e
topology: v6e:2x2x1
jax: 0.10.0
libtpu: 0.0.40
codegen_flags: <defaults>
</compile_context>

<pallas_src>
from functools import partial

import jax
import jax.numpy as jnp
from jax.experimental import pallas as pl
from jax.experimental.pallas import tpu as pltpu

_LANES = 128
_SUBLANES = 8


def _dice_loss_kernel(o_ref, t_ref, out_ref, inter_acc, sumo_acc, sumt_acc, *,
                      eps, block_rows, total_rows, need_row_mask):
    """grid = (batch, row_chunks); axis 1 is the per-sample reduction axis."""
    k = pl.program_id(1)

    @pl.when(k == 0)
    def _():
        inter_acc[...] = jnp.zeros_like(inter_acc)
        sumo_acc[...] = jnp.zeros_like(sumo_acc)
        sumt_acc[...] = jnp.zeros_like(sumt_acc)

    # (R, 128) tile of this sample; cast to f32 in-kernel (HBM stays native width).
    o = o_ref[0].astype(jnp.float32)
    t = t_ref[0].astype(jnp.float32)

    if need_row_mask:
        # Ragged tail along the row axis: rows >= total_rows of the last block
        # hold unspecified data -- zero them with a select (NaN/Inf-safe).
        # Cheap VPU work, fully hidden under the HBM DMA for this kernel.
        valid = total_rows - k * block_rows
        row_id = jax.lax.broadcasted_iota(jnp.int32, (block_rows, _LANES), 0)
        keep = row_id < valid
        o = jnp.where(keep, o, 0.0)
        t = jnp.where(keep, t, 0.0)

    # Partial accumulation into (8, 128) accumulators: reducing over the leading
    # (vreg-group) axis is pure full-vreg VPU adds -- no XLU work per tile.
    groups = block_rows // _SUBLANES
    o = o.reshape(groups, _SUBLANES, _LANES)
    t = t.reshape(groups, _SUBLANES, _LANES)
    inter_acc[...] += jnp.sum(o * t, axis=0)
    sumo_acc[...] += jnp.sum(o, axis=0)
    sumt_acc[...] += jnp.sum(t, axis=0)

    @pl.when(k == pl.num_programs(1) - 1)
    def _():
        inter = jnp.sum(inter_acc[...])
        sum_o = jnp.sum(sumo_acc[...])
        sum_t = jnp.sum(sumt_acc[...])
        score = (2.0 * inter + eps) / (sum_o + sum_t + eps)
        # Lane-broadcast the per-sample (1 - score); the wrapper picks lane 0.
        out_ref[...] = jnp.full(out_ref.shape, 1.0 - score, jnp.float32)


def dice_loss(output, target, eps: float = 1.0, max_block_rows: int = 2048):
    """DiceLoss.forward(output, target) with activation=None, reduction='mean'."""
    assert output.shape == target.shape
    b = output.shape[0]

    o2 = output.reshape(b, -1)
    t2 = target.reshape(b, -1)
    n = o2.shape[1]

    m = pl.cdiv(n, _LANES)
    padded_rows = max(m, _SUBLANES)          # at least one full sublane group
    padded_n = padded_rows * _LANES
    if padded_n != n:
        # Rare path: lane tail (n % 128 != 0) and/or fewer than 8 lane-rows per
        # sample. Zero-pad so the sample reshapes to (rows, 128); the zeros
        # contribute nothing to any of the three sums.
        # TODO(synk): mask the lane tail in-kernel as well to avoid this padded
        # HBM copy when n % 128 != 0.
        o2 = jnp.pad(o2, ((0, 0), (0, padded_n - n)))
        t2 = jnp.pad(t2, ((0, 0), (0, padded_n - n)))
    m = padded_rows

    # Sublane/lane-dense per-sample view; metadata-only reshape, no cast, no copy
    # on the common (lane-aligned) path.
    o3 = o2.reshape(b, m, _LANES)
    t3 = t2.reshape(b, m, _LANES)

    cap = max(_SUBLANES, (max_block_rows // _SUBLANES) * _SUBLANES)
    block_rows = min(cap, (m // _SUBLANES) * _SUBLANES)   # multiple of 8, <= m
    kt = pl.cdiv(m, block_rows)
    need_row_mask = (m % block_rows) != 0                 # ragged last row-chunk

    per_sample = pl.pallas_call(
        partial(_dice_loss_kernel, eps=float(eps), block_rows=block_rows,
                total_rows=m, need_row_mask=need_row_mask),
        out_shape=jax.ShapeDtypeStruct((b, 1, _LANES), jnp.float32),
        grid_spec=pltpu.PrefetchScalarGridSpec(
            num_scalar_prefetch=0,
            grid=(b, kt),
            in_specs=[
                pl.BlockSpec((1, block_rows, _LANES), lambda i, k: (i, k, 0)),
                pl.BlockSpec((1, block_rows, _LANES), lambda i, k: (i, k, 0)),
            ],
            out_specs=pl.BlockSpec((1, 1, _LANES), lambda i, k: (i, 0, 0)),
            scratch_shapes=[
                pltpu.VMEM((_SUBLANES, _LANES), jnp.float32),  # sum(o * t)
                pltpu.VMEM((_SUBLANES, _LANES), jnp.float32),  # sum(o)
                pltpu.VMEM((_SUBLANES, _LANES), jnp.float32),  # sum(t)
            ],
        ),
        compiler_params=pltpu.CompilerParams(
            dimension_semantics=("parallel", "arbitrary"),
        ),
    )(o3, t3)

    # Reduction('mean') over the batch: B scalars, negligible, done in the
    # wrapper so the batch grid axis can stay "parallel".
    return jnp.mean(per_sample[:, 0, 0])


def _dice_loss_ref(output, target, eps=1.0):
    b = output.shape[0]
    p = output.reshape(b, -1).astype(jnp.float32)
    t = target.reshape(b, -1).astype(jnp.float32)
    inter = jnp.sum(p * t, axis=1)
    scores = (2.0 * inter + eps) / (jnp.sum(p, axis=1) + jnp.sum(t, axis=1) + eps)
    return jnp.mean(1.0 - scores)


if __name__ == "__main__":
    key = jax.random.PRNGKey(0)
    k1, k2, k3, k4 = jax.random.split(key, 4)

    # NCHW inputs, as produced by a segmentation head (already sigmoid-ed
    # upstream, since activation=None in this module instantiation).
    B, C, H, W = 2, 4, 16, 16
    output = jax.random.uniform(k1, (B, C, H, W), dtype=jnp.float32)
    target = (jax.random.uniform(k2, (B, C, H, W)) > 0.5).astype(jnp.float32)

    loss = jax.block_until_ready(dice_loss(output, target, eps=1.0))
    ref = _dice_loss_ref(output, target, eps=1.0)
    assert jnp.allclose(loss, ref, atol=1e-5, rtol=1e-5), (loss, ref)

    # Awkward shape: exercises the lane-tail pad and the in-kernel ragged
    # row-chunk mask (m = 10 rows, block_rows = 8, 2 row-chunks).
    B2, C2, H2, W2 = 2, 3, 20, 20
    output2 = jax.random.uniform(k3, (B2, C2, H2, W2), dtype=jnp.float32)
    target2 = (jax.random.uniform(k4, (B2, C2, H2, W2)) > 0.5).astype(jnp.float32)

    loss2 = jax.block_until_ready(dice_loss(output2, target2, eps=1.0))
    ref2 = _dice_loss_ref(output2, target2, eps=1.0)
    assert jnp.allclose(loss2, ref2, atol=1e-5, rtol=1e-5), (loss2, ref2)

    print("KERNEL_OK")
</pallas_src>

<mosaic_0001>
module attributes {stable_mosaic.version = 11 : i64} {
  func.func @_dice_loss_kernel(%arg0: i32, %arg1: i32, %arg2: memref<1x8x128xf32, #tpu.memory_space<vmem>>, %arg3: memref<1x8x128xf32, #tpu.memory_space<vmem>>, %arg4: memref<1x1x128xf32, #tpu.memory_space<vmem>>, %arg5: memref<8x128xf32, #tpu.memory_space<vmem>>, %arg6: memref<8x128xf32, #tpu.memory_space<vmem>>, %arg7: memref<8x128xf32, #tpu.memory_space<vmem>>) attributes {dimension_semantics = [#tpu.dimension_semantics<parallel>, #tpu.dimension_semantics<arbitrary>], iteration_bounds = array<i64: 2, 1>, scalar_prefetch = 0 : i64, scratch_operands = 3 : i64, tpu.core_type = #tpu.core_type<tc>, window_params = [{transform_indices = @transform_0, window_bounds = array<i64: 1, 8, 128>}, {transform_indices = @transform_1, window_bounds = array<i64: 1, 8, 128>}, {transform_indices = @transform_2, window_bounds = array<i64: 1, 1, 128>}]} {
    %c0_i32 = arith.constant 0 : i32
    %0 = arith.cmpi eq, %arg1, %c0_i32 : i32
    %1 = arith.extui %0 : i1 to i32
    %c0_i32_0 = arith.constant 0 : i32
    %2 = arith.cmpi ne, %1, %c0_i32_0 : i32
    scf.if %2 {
      %cst_22 = arith.constant 0.000000e+00 : f32
      %25 = vector.broadcast %cst_22 : f32 to vector<8x128xf32>
      %c0_23 = arith.constant 0 : index
      %c0_24 = arith.constant 0 : index
      %26 = vector.load %arg5[%c0_23, %c0_24] : memref<8x128xf32, #tpu.memory_space<vmem>>, vector<8x128xf32>
      tpu.vector_store %arg5[%c0_23, %c0_24], %25 {strides = array<i32>} : memref<8x128xf32, #tpu.memory_space<vmem>>, vector<8x128xf32>,
      %cst_25 = arith.constant 0.000000e+00 : f32
      %27 = vector.broadcast %cst_25 : f32 to vector<8x128xf32>
      %c0_26 = arith.constant 0 : index
      %c0_27 = arith.constant 0 : index
      %28 = vector.load %arg6[%c0_26, %c0_27] : memref<8x128xf32, #tpu.memory_space<vmem>>, vector<8x128xf32>
      tpu.vector_store %arg6[%c0_26, %c0_27], %27 {strides = array<i32>} : memref<8x128xf32, #tpu.memory_space<vmem>>, vector<8x128xf32>,
      %cst_28 = arith.constant 0.000000e+00 : f32
      %29 = vector.broadcast %cst_28 : f32 to vector<8x128xf32>
      %c0_29 = arith.constant 0 : index
      %c0_30 = arith.constant 0 : index
      %30 = vector.load %arg7[%c0_29, %c0_30] : memref<8x128xf32, #tpu.memory_space<vmem>>, vector<8x128xf32>
      tpu.vector_store %arg7[%c0_29, %c0_30], %29 {strides = array<i32>} : memref<8x128xf32, #tpu.memory_space<vmem>>, vector<8x128xf32>,
    } else {
    }
    %c0 = arith.constant 0 : index
    %c0_1 = arith.constant 0 : index
    %c0_2 = arith.constant 0 : index
    %3 = vector.load %arg2[%c0, %c0_1, %c0_2] : memref<1x8x128xf32, #tpu.memory_space<vmem>>, vector<1x8x128xf32>
    %4 = vector.shape_cast %3 : vector<1x8x128xf32> to vector<8x128xf32>
    %c0_3 = arith.constant 0 : index
    %c0_4 = arith.constant 0 : index
    %c0_5 = arith.constant 0 : index
    %5 = vector.load %arg3[%c0_3, %c0_4, %c0_5] : memref<1x8x128xf32, #tpu.memory_space<vmem>>, vector<1x8x128xf32>
    %6 = vector.shape_cast %5 : vector<1x8x128xf32> to vector<8x128xf32>
    %7 = vector.shape_cast %4 : vector<8x128xf32> to vector<1x8x128xf32>
    %8 = vector.shape_cast %6 : vector<8x128xf32> to vector<1x8x128xf32>
    %c0_6 = arith.constant 0 : index
    %c0_7 = arith.constant 0 : index
    %9 = vector.load %arg5[%c0_6, %c0_7] : memref<8x128xf32, #tpu.memory_space<vmem>>, vector<8x128xf32>
    %10 = arith.mulf %7, %8 : vector<1x8x128xf32>
    %cst = arith.constant dense<0.000000e+00> : vector<8x128xf32>
    %11 = vector.multi_reduction <add>, %10, %cst [0] : vector<1x8x128xf32> to vector<8x128xf32>
    %12 = arith.addf %9, %11 : vector<8x128xf32>
    %c0_8 = arith.constant 0 : index
    %c0_9 = arith.constant 0 : index
    %13 = vector.load %arg5[%c0_8, %c0_9] : memref<8x128xf32, #tpu.memory_space<vmem>>, vector<8x128xf32>
    tpu.vector_store %arg5[%c0_8, %c0_9], %12 {strides = array<i32>} : memref<8x128xf32, #tpu.memory_space<vmem>>, vector<8x128xf32>,
    %c0_10 = arith.constant 0 : index
    %c0_11 = arith.constant 0 : index
    %14 = vector.load %arg6[%c0_10, %c0_11] : memref<8x128xf32, #tpu.memory_space<vmem>>, vector<8x128xf32>
    %cst_12 = arith.constant dense<0.000000e+00> : vector<8x128xf32>
    %15 = vector.multi_reduction <add>, %7, %cst_12 [0] : vector<1x8x128xf32> to vector<8x128xf32>
    %16 = arith.addf %14, %15 : vector<8x128xf32>
    %c0_13 = arith.constant 0 : index
    %c0_14 = arith.constant 0 : index
    %17 = vector.load %arg6[%c0_13, %c0_14] : memref<8x128xf32, #tpu.memory_space<vmem>>, vector<8x128xf32>
    tpu.vector_store %arg6[%c0_13, %c0_14], %16 {strides = array<i32>} : memref<8x128xf32, #tpu.memory_space<vmem>>, vector<8x128xf32>,
    %c0_15 = arith.constant 0 : index
    %c0_16 = arith.constant 0 : index
    %18 = vector.load %arg7[%c0_15, %c0_16] : memref<8x128xf32, #tpu.memory_space<vmem>>, vector<8x128xf32>
    %cst_17 = arith.constant dense<0.000000e+00> : vector<8x128xf32>
    %19 = vector.multi_reduction <add>, %8, %cst_17 [0] : vector<1x8x128xf32> to vector<8x128xf32>
    %20 = arith.addf %18, %19 : vector<8x128xf32>
    %c0_18 = arith.constant 0 : index
    %c0_19 = arith.constant 0 : index
    %21 = vector.load %arg7[%c0_18, %c0_19] : memref<8x128xf32, #tpu.memory_space<vmem>>, vector<8x128xf32>
    tpu.vector_store %arg7[%c0_18, %c0_19], %20 {strides = array<i32>} : memref<8x128xf32, #tpu.memory_space<vmem>>, vector<8x128xf32>,
    %c0_i32_20 = arith.constant 0 : i32
    %22 = arith.cmpi eq, %arg1, %c0_i32_20 : i32
    %23 = arith.extui %22 : i1 to i32
    %c0_i32_21 = arith.constant 0 : i32
    %24 = arith.cmpi ne, %23, %c0_i32_21 : i32
    scf.if %24 {
      %c0_22 = arith.constant 0 : index
      %c0_23 = arith.constant 0 : index
      %25 = vector.load %arg5[%c0_22, %c0_23] : memref<8x128xf32, #tpu.memory_space<vmem>>, vector<8x128xf32>
      %26 = vector.shape_cast %25 : vector<8x128xf32> to vector<1x8x128xf32>
      %cst_24 = arith.constant dense<0.000000e+00> : vector<1xf32>
      %27 = vector.multi_reduction <add>, %26, %cst_24 [1, 2] : vector<1x8x128xf32> to vector<1xf32>
      %28 = vector.shape_cast %27 : vector<1xf32> to vector<1x1x1xf32>
      %29 = vector.extract %28[0, 0, 0] : f32 from vector<1x1x1xf32>
      %c0_25 = arith.constant 0 : index
      %c0_26 = arith.constant 0 : index
      %30 = vector.load %arg6[%c0_25, %c0_26] : memref<8x128xf32, #tpu.memory_space<vmem>>, vector<8x128xf32>
      %31 = vector.shape_cast %30 : vector<8x128xf32> to vector<1x8x128xf32>
      %cst_27 = arith.constant dense<0.000000e+00> : vector<1xf32>
      %32 = vector.multi_reduction <add>, %31, %cst_27 [1, 2] : vector<1x8x128xf32> to vector<1xf32>
      %33 = vector.shape_cast %32 : vector<1xf32> to vector<1x1x1xf32>
      %34 = vector.extract %33[0, 0, 0] : f32 from vector<1x1x1xf32>
      %c0_28 = arith.constant 0 : index
      %c0_29 = arith.constant 0 : index
      %35 = vector.load %arg7[%c0_28, %c0_29] : memref<8x128xf32, #tpu.memory_space<vmem>>, vector<8x128xf32>
      %36 = vector.shape_cast %35 : vector<8x128xf32> to vector<1x8x128xf32>
      %cst_30 = arith.constant dense<0.000000e+00> : vector<1xf32>
      %37 = vector.multi_reduction <add>, %36, %cst_30 [1, 2] : vector<1x8x128xf32> to vector<1xf32>
      %38 = vector.shape_cast %37 : vector<1xf32> to vector<1x1x1xf32>
      %39 = vector.extract %38[0, 0, 0] : f32 from vector<1x1x1xf32>
      %cst_31 = arith.constant 2.000000e+00 : f32
      %40 = arith.mulf %cst_31, %29 : f32
      %cst_32 = arith.constant 1.000000e+00 : f32
      %41 = arith.addf %40, %cst_32 : f32
      %42 = arith.addf %34, %39 : f32
      %cst_33 = arith.constant 1.000000e+00 : f32
      %43 = arith.addf %42, %cst_33 : f32
      %44 = arith.divf %41, %43 : f32
      %cst_34 = arith.constant 1.000000e+00 : f32
      %45 = arith.subf %cst_34, %44 : f32
      %46 = vector.broadcast %45 : f32 to vector<1x1x128xf32>
      %c0_35 = arith.constant 0 : index
      %c0_36 = arith.constant 0 : index
      %c0_37 = arith.constant 0 : index
      %47 = vector.load %arg4[%c0_35, %c0_36, %c0_37] : memref<1x1x128xf32, #tpu.memory_space<vmem>>, vector<1x1x128xf32>
      tpu.vector_store %arg4[%c0_35, %c0_36, %c0_37], %46 {strides = array<i32>} : memref<1x1x128xf32, #tpu.memory_space<vmem>>, vector<1x1x128xf32>,
    } else {
    }
    return
  }
  func.func @transform_0(%arg0: i32, %arg1: i32) -> (i32, i32, i32) {
    %c0_i32 = arith.constant 0 : i32
    %c0_i32_0 = arith.constant 0 : i32
    return %arg0, %arg1, %c0_i32 : i32, i32, i32
  }
  func.func @transform_1(%arg0: i32, %arg1: i32) -> (i32, i32, i32) {
    %c0_i32 = arith.constant 0 : i32
    %c0_i32_0 = arith.constant 0 : i32
    return %arg0, %arg1, %c0_i32 : i32, i32, i32
  }
  func.func @transform_2(%arg0: i32, %arg1: i32) -> (i32, i32, i32) {
    %c0_i32 = arith.constant 0 : i32
    %c0_i32_0 = arith.constant 0 : i32
    %c0_i32_1 = arith.constant 0 : i32
    return %arg0, %c0_i32, %c0_i32_0 : i32, i32, i32
  }
}

</mosaic_0001>

<llo_original>
// kernel: tpu_custom_call.1
$region0: #{tpu_custom_call.1}
  #allocation0 [shape = 'u32[]', space=smem, size = 0x4, offset = 0x4, fixed_abs, tag = 'smem constant byte address 0x4 - core index']
  #allocation1 [shape = 'u32[144,128]{1,0:T(1,128)}', space=vmem, size = 0x12000, scoped, tag = 'internal scratch']
  #allocation2 [shape = 'f32[8,128]{1,0:T(8,128)}', space=vmem, size = 0x1000, scoped, tag = 'scratch operand']
  #allocation3 [shape = 'f32[8,128]{1,0:T(8,128)}', space=vmem, size = 0x1000, scoped, tag = 'scratch operand']
  #allocation4 [shape = 'f32[8,128]{1,0:T(8,128)}', space=vmem, size = 0x1000, scoped, tag = 'scratch operand']
  %s0 = inlined_call_operand.hbm [shape: f32[2,8,128], index: 0, kind: input, shape index: {}]
  %s1 = inlined_call_operand.hbm [shape: f32[2,8,128], index: 1, kind: input, shape index: {}]
  %s2 = inlined_call_operand.hbm [shape: f32[2,1,128], index: 2, kind: output, shape index: {}]
  %s3 = sld [smem:[#allocation0]]
  $region57: #{tpu_custom_call.1} parent=0
    _
  %s5 = ssub.s32 1, %s3
  %s6 = scalar_select 0, %s5, %s3
  $region1: #{tpu_custom_call.1} parent=0
    #allocation5 [shape = 'u8[8192]{0}', space=vmem, size = 0x2000, scoped, tag = 'input window, operand 0']
    #allocation6 [shape = 's32[2]{0}', space=sflag, size = 0x8, scoped, tag = 'scoped memory for tpu_custom_call.1']
    #allocation7 [shape = 's32[2]{0}', space=sflag, size = 0x8, scoped, tag = 'scoped memory for tpu_custom_call.1']
    #allocation8 [shape = 'u8[8192]{0}', space=vmem, size = 0x2000, scoped, tag = 'input window, operand 1']
    #allocation9 [shape = 's32[2]{0}', space=sflag, size = 0x8, scoped, tag = 'scoped memory for tpu_custom_call.1']
    #allocation10 [shape = 'u8[1024]{0}', space=vmem, size = 0x400, scoped, tag = 'output window, operand 0']
    %7 = vsyncpa [#allocation6], 0
    %s8 = scalar_lea.sflag [#allocation6], 1
    %9 = vsyncpa %s8, 0
    %10 = vsyncpa [#allocation9], 0
    %s11 = scalar_lea.sflag [#allocation9], 1
    %12 = vsyncpa %s11, 0
    %13 = vsyncpa [#allocation7], 0
    %s14 = scalar_lea.sflag [#allocation7], 1
    %15 = vsyncpa %s14, 0
    loop: start=0, step=1, limit=4
    $region2: #{tpu_custom_call.1} parent=1 // loop_pre_header
      _
    $region3: #{tpu_custom_call.1} parent=1 // loop_header
      %s17 = sphi 0, %s21
      %p18 = scmp.ge.s32.totalorder %s17, 4
      %s24 = sphi 0, %s36
      %s25 = sphi 0, %s32
      %s26 = sphi 0, %s24
      %s27 = sphi 0, %s25
      %s28 = sphi 0, %s26
      %s29 = sphi 0, %s27
      %s41 = sphi 0, %s43
      %s44 = sphi 0, %s41
      %s45 = sphi 0, %s44
      %s61 = sphi 0, %s45
      %s69 = sphi 0, %s71
      %s72 = sphi 0, %s69
      %s73 = sphi 0, %s72
      %s89 = sphi 0, %s73
      %s95 = sphi 0, %s97
      %s98 = sphi 0, %s95
      %s99 = sphi 0, %s98
      %s115 = sphi 0, %s99
    $region4: #{tpu_custom_call.1} parent=1 // loop_header_branch
      %20 = sbr.rel (%p18) target = $region8
    $region5: #{tpu_custom_call.1} parent=1 // loop_body
      %s22 = ssub.s32 %s17, 1
      %s23 = ssub.s32 %s17, 2
      %s30 = sadd.s32 1, %s25
      %p31 = scmp.ge.s32.totalorder %s30, 1
      %s32 = scalar_select %p31, 0, %s30
      %s33 = sadd.s32 1, %s24
      %s34 = scalar_select %p31, %s33, %s24
      %p35 = scmp.ge.s32.totalorder %s34, 2
      %s36 = scalar_select %p35, 0, %s34
      %s37 = ssub.s32 %s24, %s36
      %s38 = ssub.s32 %s25, %s32
      %s39 = sor.u32 %s37, %s38
      %p40 = scmp.eq.s32.totalorder %s39, 0
      %s42 = sadd.s32 %s41, 1
      %s43 = scalar_select %p40, %s41, %s42
      %p46 = pneg %p40
      %p47 = scmp.eq.s32.totalorder %s17, 1
      %p48 = por %p46, %p47
      %p49 = scmp.ne.s32.totalorder %s41, %s44
      %p50 = scmp.eq.s32.totalorder %s17, 0
      %p51 = por %p49, %p50
      %p52 = scmp.ne.s32.totalorder %s41, %s44
      %p53 = scmp.eq.s32.totalorder %s22, 1
      %p54 = por %p52, %p53
      %p55 = scmp.ne.s32.totalorder %s44, %s45
      %p56 = scmp.eq.s32.totalorder %s22, 0
      %p57 = por %p55, %p56
      %p58 = scmp.ne.s32.totalorder %s44, %s45
      %p59 = scmp.eq.s32.totalorder %s23, 1
      %p60 = por %p58, %p59
      %p62 = scmp.ne.s32.totalorder %s45, %s61
      %p63 = scmp.eq.s32.totalorder %s23, 0
      %p64 = por %p62, %p63
      %s65 = ssub.s32 %s24, %s36
      %s66 = ssub.s32 %s25, %s32
      %s67 = sor.u32 %s65, %s66
      %p68 = scmp.eq.s32.totalorder %s67, 0
      %s70 = sadd.s32 %s69, 1
      %s71 = scalar_select %p68, %s69, %s70
      %p74 = pneg %p68
      %p75 = scmp.eq.s32.totalorder %s17, 1
      %p76 = por %p74, %p75
      %p77 = scmp.ne.s32.totalorder %s69, %s72
      %p78 = scmp.eq.s32.totalorder %s17, 0
      %p79 = por %p77, %p78
      %p80 = scmp.ne.s32.totalorder %s69, %s72
      %p81 = scmp.eq.s32.totalorder %s22, 1
      %p82 = por %p80, %p81
      %p83 = scmp.ne.s32.totalorder %s72, %s73
      %p84 = scmp.eq.s32.totalorder %s22, 0
      %p85 = por %p83, %p84
      %p86 = scmp.ne.s32.totalorder %s72, %s73
      %p87 = scmp.eq.s32.totalorder %s23, 1
      %p88 = por %p86, %p87
      %p90 = scmp.ne.s32.totalorder %s73, %s89
      %p91 = scmp.eq.s32.totalorder %s23, 0
      %p92 = por %p90, %p91
      %s93 = ssub.s32 %s24, %s36
      %p94 = scmp.eq.s32.totalorder %s93, 0
      %s96 = sadd.s32 %s95, 1
      %s97 = scalar_select %p94, %s95, %s96
      %p100 = pneg %p94
      %p101 = scmp.eq.s32.totalorder %s17, 1
      %p102 = por %p100, %p101
      %p103 = scmp.ne.s32.totalorder %s95, %s98
      %p104 = scmp.eq.s32.totalorder %s17, 0
      %p105 = por %p103, %p104
      %p106 = scmp.ne.s32.totalorder %s95, %s98
      %p107 = scmp.eq.s32.totalorder %s22, 1
      %p108 = por %p106, %p107
      %p109 = scmp.ne.s32.totalorder %s98, %s99
      %p110 = scmp.eq.s32.totalorder %s22, 0
      %p111 = por %p109, %p110
      %p112 = scmp.ne.s32.totalorder %s98, %s99
      %p113 = scmp.eq.s32.totalorder %s23, 1
      %p114 = por %p112, %p113
      %p116 = scmp.ne.s32.totalorder %s99, %s115
      %p117 = scmp.eq.s32.totalorder %s23, 0
      %p118 = por %p116, %p117
      %p119 = scmp.le.s32.totalorder 1, %s17
      %p120 = scmp.lt.s32.totalorder %s17, 3
      %p121 = pnand %p119, %p120
      %p122 = pneg %p121
      // Predicated region
      $region9: #{tpu_custom_call.1} parent=5 // pred_check
        _
      $region10: #{tpu_custom_call.1} parent=5 // pred_check_branch
        %124 = sbr.rel (%p121) target = $region12
      $region11: #{tpu_custom_call.1} parent=5 // pred_region
        %s125 = ssub.s32 %s17, 1
      $region12: #{tpu_custom_call.1} parent=5 // pred_fallthru
        _
      %p126 = scmp.lt.s32.totalorder %s17, 2
      // Predicated region
      $region13: #{tpu_custom_call.1} parent=5 // pred_check
        %p127 = pneg %p126
      $region14: #{tpu_custom_call.1} parent=5 // pred_check_branch
        %129 = sbr.rel (%p127) target = $region16
      $region15: #{tpu_custom_call.1} parent=5 // pred_region
        // Predicated region
        $region17: #{tpu_custom_call.1} parent=15 // pred_check
          %p130 = pneg %p51
        $region18: #{tpu_custom_call.1} parent=15 // pred_check_branch
          %132 = sbr.rel (%p130) target = $region20
        $region19: #{tpu_custom_call.1} parent=15 // pred_region
          %s133 = sand.u32 %s41, 1
          %s134 = scalar_lea.sflag [#allocation6], %s133
          %s135 = sand.u32 %s41, 1
          %s136 = smul.addr %s135, 8
          %s137 = scalar_lea.vmem [#allocation5], %s136
          %s139 = ssub.s32 128, 128
          %140 = vsyncadd %s134, %s139
          %s141 = sadd.s32 %s25, %s24
          %s142 = smul.addr %s141, 128
          %s143 = scalar_lea.hbm %s0, %s142
          %s145 = sshll.u32 %s137, 4
          %s146 = int_to_ptr.vmem [resolvable:$true] %s145
          %148 = dma.hbm_to_vmem [thread:$0]  %s143, 128, %s146, %s134
        $region20: #{tpu_custom_call.1} parent=15 // pred_fallthru
          _
        // Predicated region
        $region21: #{tpu_custom_call.1} parent=15 // pred_check
          %p149 = pneg %p79
        $region22: #{tpu_custom_call.1} parent=15 // pred_check_branch
          %151 = sbr.rel (%p149) target = $region24
        $region23: #{tpu_custom_call.1} parent=15 // pred_region
          %s152 = sand.u32 %s69, 1
          %s153 = scalar_lea.sflag [#allocation9], %s152
          %s154 = sand.u32 %s69, 1
          %s155 = smul.addr %s154, 8
          %s156 = scalar_lea.vmem [#allocation8], %s155
          %s158 = ssub.s32 128, 128
          %159 = vsyncadd %s153, %s158
          %s160 = sadd.s32 %s25, %s24
          %s161 = smul.addr %s160, 128
          %s162 = scalar_lea.hbm %s1, %s161
          %s164 = sshll.u32 %s156, 4
          %s165 = int_to_ptr.vmem [resolvable:$true] %s164
          %167 = dma.hbm_to_vmem [thread:$0]  %s162, 128, %s165, %s153
        $region24: #{tpu_custom_call.1} parent=15 // pred_fallthru
          _
      $region16: #{tpu_custom_call.1} parent=5 // pred_fallthru
        _
      %p168 = scmp.le.s32.totalorder 1, %s17
      %p169 = scmp.lt.s32.totalorder %s17, 3
      %p170 = pnand %p168, %p169
      %p171 = pneg %p170
      // Predicated region
      $region25: #{tpu_custom_call.1} parent=5 // pred_check
        _
      $region26: #{tpu_custom_call.1} parent=5 // pred_check_branch
        %173 = sbr.rel (%p170) target = $region28
      $region27: #{tpu_custom_call.1} parent=5 // pred_region
        %s174 = ssub.s32 %s17, 1
        %s175 = sand.u32 %s44, 1
        %s176 = scalar_lea.sflag [#allocation6], %s175
        %s177 = sand.u32 %s44, 1
        %s178 = smul.addr %s177, 8
        %s179 = scalar_lea.vmem [#allocation5], %s178
        // Predicated region
        $region29: #{tpu_custom_call.1} parent=27 // pred_check
          %p180 = pneg %p57
        $region30: #{tpu_custom_call.1} parent=27 // pred_check_branch
          %182 = sbr.rel (%p180) target = $region32
        $region31: #{tpu_custom_call.1} parent=27 // pred_region
          %183 = dma.done %s176, 128
        $region32: #{tpu_custom_call.1} parent=27 // pred_fallthru
          _
        %s184 = sand.u32 %s72, 1
        %s185 = scalar_lea.sflag [#allocation9], %s184
        %s186 = sand.u32 %s72, 1
        %s187 = smul.addr %s186, 8
        %s188 = scalar_lea.vmem [#allocation8], %s187
        // Predicated region
        $region33: #{tpu_custom_call.1} parent=27 // pred_check
          %p189 = pneg %p85
        $region34: #{tpu_custom_call.1} parent=27 // pred_check_branch
          %191 = sbr.rel (%p189) target = $region36
        $region35: #{tpu_custom_call.1} parent=27 // pred_region
          %192 = dma.done %s185, 128
        $region36: #{tpu_custom_call.1} parent=27 // pred_fallthru
          _
        %s193 = sand.u32 %s44, 1
        %s194 = scalar_lea.sflag [#allocation6], %s193
        %s195 = sand.u32 %s44, 1
        %s196 = smul.addr %s195, 8
        %s197 = scalar_lea.vmem [#allocation5], %s196
        %p198 = pneg %p57
        %p199 = pneg %p54
        %s200 = sand.u32 %s72, 1
        %s201 = scalar_lea.sflag [#allocation9], %s200
        %s202 = sand.u32 %s72, 1
        %s203 = smul.addr %s202, 8
        %s204 = scalar_lea.vmem [#allocation8], %s203
        %p205 = pneg %p85
        %p206 = pneg %p82
        %p207 = pneg %p111
        %p208 = pneg %p108
        %s209 = sand.u32 %s98, 1
        %s210 = scalar_lea.sflag [#allocation7], %s209
        %s211 = sand.u32 %s98, 1
        %s212 = scalar_lea.vmem [#allocation10], %s211
        %p213 = scmp.eq.s32.totalorder %s27, 0
        // Predicated region
        $region37: #{tpu_custom_call.1} parent=27 // pred_check
          %p214 = pneg %p213
        $region38: #{tpu_custom_call.1} parent=27 // pred_check_branch
          %216 = sbr.rel (%p214) target = $region40
        $region39: #{tpu_custom_call.1} parent=27 // pred_region
          %217 = vst [vmem:[#allocation2] sm:$0xff] 0.0
          %218 = vst [vmem:[#allocation3] sm:$0xff] 0.0
          %219 = vst [vmem:[#allocation4] sm:$0xff] 0.0
        $region40: #{tpu_custom_call.1} parent=27 // pred_fallthru
          _
        %v220 = vld [vmem:[%s179] sm:$0xff]
        %v221 = vld [vmem:[%s188] sm:$0xff]
        %v222 = vld [vmem:[#allocation2] sm:$0xff]
        %v223 = vmul.f32 %v220, %v221
        %v224 = vadd.f32 %v223, 0.0
        %v225 = vadd.f32 %v222, %v224
        %226 = vst [vmem:[#allocation2] sm:$0xff] %v225
        %v227 = vld [vmem:[#allocation3] sm:$0xff]
        %v228 = vadd.f32 %v220, 0.0
        %v229 = vadd.f32 %v227, %v228
        %230 = vst [vmem:[#allocation3] sm:$0xff] %v229
        %v231 = vld [vmem:[#allocation4] sm:$0xff]
        %v232 = vadd.f32 %v221, 0.0
        %v233 = vadd.f32 %v231, %v232
        %234 = vst [vmem:[#allocation4] sm:$0xff] %v233
        // Predicated region
        $region41: #{tpu_custom_call.1} parent=27 // pred_check
          %p235 = pneg %p213
        $region42: #{tpu_custom_call.1} parent=27 // pred_check_branch
          %237 = sbr.rel (%p235) target = $region44
        $region43: #{tpu_custom_call.1} parent=27 // pred_region
          %v238 = vld [vmem:[#allocation2] sm:$0xff]
          %239 = vadd.xlane.f32.xlu0 %v238
          %v240 = vpop.xlane.xlu0 %239
          %v241 = vrot.slane %v240, 4
          %v242 = vadd.f32 %v240, %v241
          %v243 = vrot.slane %v242, 2
          %v244 = vadd.f32 %v242, %v243
          %v245 = vrot.slane %v244, 1
          %v246 = vadd.f32 %v244, %v245
          %s247 = vtos %v246
          %v248 = vld [vmem:[#allocation3] sm:$0xff]
          %249 = vadd.xlane.f32.xlu0 %v248
          %v250 = vpop.xlane.xlu0 %249
          %v251 = vrot.slane %v250, 4
          %v252 = vadd.f32 %v250, %v251
          %v253 = vrot.slane %v252, 2
          %v254 = vadd.f32 %v252, %v253
          %v255 = vrot.slane %v254, 1
          %v256 = vadd.f32 %v254, %v255
          %s257 = vtos %v256
          %v258 = vld [vmem:[#allocation4] sm:$0xff]
          %259 = vadd.xlane.f32.xlu0 %v258
          %v260 = vpop.xlane.xlu0 %259
          %v261 = vrot.slane %v260, 4
          %v262 = vadd.f32 %v260, %v261
          %v263 = vrot.slane %v262, 2
          %v264 = vadd.f32 %v262, %v263
          %v265 = vrot.slane %v264, 1
          %v266 = vadd.f32 %v264, %v265
          %s267 = vtos %v266
          %s268 = smul.f32 %s247, 2.0
          %s269 = sadd.f32 %s268, 1.0
          %s270 = sadd.f32 %s257, %s267
          %s271 = sadd.f32 %s270, 1.0
          %v272 = vstv %s271
          %v273 = vrcp.pop %v272
          %s274 = vtos %v273
          %s275 = smul.f32 %s269, %s274
          %s276 = ssub.f32 1.0, %s275
          %v277 = vstv %s276
          %278 = vst [vmem:[%s212] sm:$0x1] %v277
        $region44: #{tpu_custom_call.1} parent=27 // pred_fallthru
          _
        %s279 = sand.u32 %s98, 1
        %s280 = scalar_lea.sflag [#allocation7], %s279
        %s281 = sand.u32 %s98, 1
        %s282 = scalar_lea.vmem [#allocation10], %s281
        // Predicated region
        $region45: #{tpu_custom_call.1} parent=27 // pred_check
          %p283 = pneg %p108
        $region46: #{tpu_custom_call.1} parent=27 // pred_check_branch
          %285 = sbr.rel (%p283) target = $region48
        $region47: #{tpu_custom_call.1} parent=27 // pred_region
          %s287 = ssub.s32 16, 16
          %288 = vsyncadd %s280, %s287
          %s289 = smul.addr %s26, 16
          %s290 = scalar_lea.hbm %s2, %s289
          %s292 = sshll.u32 %s282, 4
          %s293 = int_to_ptr.vmem [resolvable:$true] %s292
          %295 = dma.vmem_to_hbm [thread:$0]  %s293, 16, %s290, %s280
        $region48: #{tpu_custom_call.1} parent=27 // pred_fallthru
          _
      $region28: #{tpu_custom_call.1} parent=5 // pred_fallthru
        _
      %p296 = scmp.le.s32.totalorder 2, %s17
      // Predicated region
      $region49: #{tpu_custom_call.1} parent=5 // pred_check
        %p297 = pneg %p296
      $region50: #{tpu_custom_call.1} parent=5 // pred_check_branch
        %299 = sbr.rel (%p297) target = $region52
      $region51: #{tpu_custom_call.1} parent=5 // pred_region
        %s300 = ssub.s32 %s17, 2
        // Predicated region
        $region53: #{tpu_custom_call.1} parent=51 // pred_check
          %p301 = pneg %p114
        $region54: #{tpu_custom_call.1} parent=51 // pred_check_branch
          %303 = sbr.rel (%p301) target = $region56
        $region55: #{tpu_custom_call.1} parent=51 // pred_region
          %s304 = sand.u32 %s99, 1
          %s305 = scalar_lea.sflag [#allocation7], %s304
          %s306 = sand.u32 %s99, 1
          %s307 = scalar_lea.vmem [#allocation10], %s306
          %308 = dma.done %s305, 16
        $region56: #{tpu_custom_call.1} parent=51 // pred_fallthru
          _
      $region52: #{tpu_custom_call.1} parent=5 // pred_fallthru
        _
    $region6: #{tpu_custom_call.1} parent=1 // loop_footer
      %s21 = sadd.s32 1, %s17
    $region7: #{tpu_custom_call.1} parent=1 // loop_footer_branch
      %16 = sbr.rel target = $region3
    $region8: #{tpu_custom_call.1} parent=1 // loop_exit
      _
    %309 = vsyncpa [#allocation6], 1
    %s310 = scalar_lea.sflag [#allocation6], 1
    %311 = vsyncpa %s310, 1
    %312 = vsyncpa [#allocation9], 1
    %s313 = scalar_lea.sflag [#allocation9], 1
    %314 = vsyncpa %s313, 1
    %315 = vsyncpa [#allocation7], 1
    %s316 = scalar_lea.sflag [#allocation7], 1
    %317 = vsyncpa %s316, 1

</llo_original>
